<compile_context>
chip_gen: v6e
topology: v6e:2x2x1
jax: 0.10.0
libtpu: 0.0.40
codegen_flags: <defaults>
</compile_context>

<pallas_src>
import functools

import jax
import jax.numpy as jnp
from jax import lax
from jax.experimental import pallas as pl
from jax.experimental.pallas import tpu as pltpu

_LANE = 128


def _round_up(x, m):
    return (x + m - 1) // m * m


def _vmem_limits():
    """Scoped-VMEM limit and tile budget derived from the actual chip.

    v5e/v6e (128 MiB physical) -> ~96 MiB limit, ~64 MiB tile budget.
    v7x (64 MiB per TensorCore) -> ~48 MiB limit, ~32 MiB tile budget.
    """
    phys = 128 * 1024 * 1024
    try:
        phys = int(getattr(pltpu.get_tpu_info(), "vmem_capacity_bytes", phys))
    except Exception:
        pass
    limit = max(min((phys * 3) // 4, 100 * 1024 * 1024), 32 * 1024 * 1024)
    budget = max((limit * 2) // 3, 16 * 1024 * 1024)
    return limit, budget


_VMEM_LIMIT, _VMEM_BUDGET = _vmem_limits()


# ------------------------------------------------------------ weight prep
def pad_expert_params(expert_w, expert_b):
    """One-time prep (call OUTSIDE the step function): zero-pad out_dim to a
    multiple of 128 lanes and lay the bias out as (E, 1, Dp)."""
    E, _, D = expert_w.shape
    Dp = _round_up(D, _LANE)
    if Dp != D:
        expert_w = jnp.pad(expert_w, ((0, 0), (0, 0), (0, Dp - D)))
        expert_b = jnp.pad(expert_b, ((0, 0), (0, Dp - D)))
    return expert_w, expert_b.reshape(E, 1, Dp)


# ------------------------------------------------------------ expert kernel
def _moe_kernel(sel_ref, rw_ref, x_ref, w_ref, b_ref, o_ref, acc_ref):
    # sel_ref (scalar prefetch, SMEM) is consumed only by the BlockSpec index_maps.
    del sel_ref
    k = pl.program_id(2)
    h = pl.program_id(3)
    nk = pl.num_programs(2)
    nh = pl.num_programs(3)

    # Routing weight of expert slot k for this token tile, already laid out as a
    # (tn, 1) column (no per-step iota/where/cross-lane reduce).
    rw_k = rw_ref[...]                                           # (tn, 1), x dtype

    # Pre-scale the activation tile (tn*th VALU mults) instead of the (tn, td)
    # partial product; the matmul operand stays in the input dtype so bf16
    # callers hit the bf16 MXU fast path.  f32 accumulation on the MXU.
    part = jnp.dot(x_ref[...] * rw_k, w_ref[...],
                   preferred_element_type=jnp.float32)           # (tn, td) f32

    first = (k == 0) & (h == 0)

    @pl.when(first)
    def _():                      # first-step overwrite: no explicit zero pass
        acc_ref[...] = part

    @pl.when(jnp.logical_not(first))
    def _():
        acc_ref[...] += part

    @pl.when(h == nh - 1)
    def _():                      # bias contributes once per expert, scaled by rw_k
        acc_ref[...] += rw_k.astype(jnp.float32) * b_ref[...].astype(jnp.float32)

    @pl.when((k == nk - 1) & (h == nh - 1))
    def _():
        o_ref[...] = acc_ref[...].astype(o_ref.dtype)


def _moe_tiles(N, H, Dp, x_isz, w_isz, o_isz):
    """Pick (token, contraction, out-column) tiles against the VMEM budget.

    Priority: keep tn large (expert-weight HBM traffic ~ K * N/tn * H * Dp and
    the weight-stream arithmetic intensity is ~tn flop/byte), then td, then th.
    th/td prefer >=256 (2x256x256 MXU on v6e/v7x); 128 only as fallback.
    """
    tn_cands = [c for c in (1024, 512, 256, 128) if N % c == 0] or [N]
    th_cands = [c for c in (512, 256, 128) if H % c == 0] or [H]
    td_cands = [c for c in (512, 256, 128) if Dp % c == 0] or [Dp]

    def est(tn, th, td):
        ins = (2 * tn * th * x_isz            # x tile (double-buffered)
               + 2 * th * td * w_isz          # expert weight tile
               + 2 * td * w_isz               # bias tile
               + 2 * tn * _LANE * x_isz)      # (tn,1) routing column, lane-padded
        outs = 2 * tn * td * o_isz            # output tile
        scratch = 4 * tn * td                 # f32 accumulator
        return ins + outs + scratch

    for tn in tn_cands:
        for td in td_cands:
            for th in th_cands:
                if est(tn, th, td) <= _VMEM_BUDGET:
                    return tn, th, td
    return tn_cands[-1], th_cands[-1], td_cands[-1]


def moe_experts(x, rw_t, sel, expert_w, expert_b, *, out_dtype):
    """out[n] = sum_k rw[k, n] * (x[n] @ W[sel[k]] + b[sel[k]])  ->  (N, Dp)."""
    N, H = x.shape
    _, _, Dp = expert_w.shape
    K = rw_t.shape[0]
    tn, th, td = _moe_tiles(
        N, H, Dp,
        jnp.dtype(x.dtype).itemsize,
        jnp.dtype(expert_w.dtype).itemsize,
        jnp.dtype(out_dtype).itemsize,
    )
    grid = (N // tn, Dp // td, K, H // th)

    return pl.pallas_call(
        _moe_kernel,
        out_shape=jax.ShapeDtypeStruct((N, Dp), out_dtype),
        grid_spec=pltpu.PrefetchScalarGridSpec(
            num_scalar_prefetch=1,        # `sel` lands in SMEM, drives index_maps
            grid=grid,
            in_specs=[
                # routing weight column of slot k: (tn, 1)
                pl.BlockSpec((None, tn, 1), lambda i, d, k, h, s: (k, i, 0)),
                # token activations: (tn, th)
                pl.BlockSpec((tn, th), lambda i, d, k, h, s: (i, h)),
                # selected expert weight tile: (th, td)
                # TODO(synk): if the weight DMA is still exposed after enlarging
                # tn, add pipeline_mode=pl.Buffered(3) here (costs VMEM).
                pl.BlockSpec((None, th, td), lambda i, d, k, h, s: (s[k], h, d)),
                # selected expert bias tile: (1, td)
                pl.BlockSpec((None, 1, td), lambda i, d, k, h, s: (s[k], 0, d)),
            ],
            out_specs=pl.BlockSpec((tn, td), lambda i, d, k, h, s: (i, d)),
            scratch_shapes=[pltpu.VMEM((tn, td), jnp.float32)],
        ),
        compiler_params=pltpu.CompilerParams(
            dimension_semantics=("parallel", "parallel", "arbitrary", "arbitrary"),
            vmem_limit_bytes=_VMEM_LIMIT,
        ),
    )(sel, rw_t, x, expert_w, expert_b)


# ------------------------------------------------------------- module forward
def sparse_moe_block(x, gate_w, expert_w, expert_b, *, top_k, out_dim=None):
    """x: (B,S,H); gate_w: (E,H); expert_w: (E,H,Dp); expert_b: (E,Dp)|(E,1,Dp).

    Feed expert weights pre-padded via `pad_expert_params` (one-time prep).
    For best throughput feed x / expert_w as bf16 (accumulation stays f32).
    """
    B, S, H = x.shape
    N = B * S
    E, _, Dp = expert_w.shape
    out_dim = Dp if out_dim is None else out_dim
    xf = x.reshape(N, H)

    if Dp % _LANE != 0:
        # Fallback only; production should pre-pad once via pad_expert_params.
        expert_w, expert_b = pad_expert_params(expert_w, expert_b.reshape(E, -1))
        Dp = expert_w.shape[2]
    if expert_b.ndim == 2:
        expert_b = expert_b.reshape(E, 1, Dp)

    # Router (tiny N x H x E matmul + global top-k + softmax). Kept in plain
    # XLA per the perf review: an (N, E) Pallas output with E << 128 forces
    # masked stores / <10% MXU utilization plus an extra kernel launch.
    router_logits = jnp.dot(xf, gate_w.T)                            # (N, E)
    # Module spec: single global top-k over token-summed logits.
    sel = lax.top_k(jnp.sum(router_logits, axis=0), top_k)[1].astype(jnp.int32)
    logits_sel = jnp.take(router_logits, sel, axis=1)                # (N, K)
    rw = jax.nn.softmax(logits_sel.astype(jnp.float32), axis=1)      # f32 softmax
    rw = rw.astype(x.dtype)                                          # module casts to hidden dtype
    rw_t = jnp.transpose(rw)[:, :, None]                             # (K, N, 1)

    out = moe_experts(xf, rw_t, sel, expert_w, expert_b, out_dtype=x.dtype)
    if out_dim != Dp:
        out = out[:, :out_dim]
    return out.reshape(B, S, out_dim)


if __name__ == "__main__":
    # config: hidden_size=32, num_local_experts=4, num_experts_per_tok=2, out_dim=32
    B, S, H = 2, 8, 32
    E, K, D = 4, 2, 32

    key = jax.random.PRNGKey(0)
    k1, k2, k3, k4 = jax.random.split(key, 4)
    x = jax.random.normal(k1, (B, S, H), jnp.float32)
    gate_w = 0.1 * jax.random.normal(k2, (E, H), jnp.float32)        # nn.Linear(H,E).weight
    expert_w = 0.1 * jax.random.normal(k3, (E, H, D), jnp.float32)   # per-expert Linear weight (pre-transposed)
    expert_b = 0.1 * jax.random.normal(k4, (E, D), jnp.float32)      # per-expert Linear bias

    # one-time weight prep outside the step function (no per-call padding)
    expert_w_p, expert_b_p = pad_expert_params(expert_w, expert_b)

    fwd = jax.jit(functools.partial(sparse_moe_block, top_k=K, out_dim=D))
    out = fwd(x, gate_w, expert_w_p, expert_b_p)
    jax.block_until_ready(out)

    # pure-JAX reference for correctness (mirrors the PyTorch module)
    xf = x.reshape(-1, H)
    rl = xf @ gate_w.T
    sel = lax.top_k(jnp.sum(rl, axis=0), K)[1]
    rw = jax.nn.softmax(rl[:, sel].astype(jnp.float32), axis=1).astype(x.dtype)
    ref = jnp.zeros((B * S, D), x.dtype)
    for i in range(K):
        ref = ref + rw[:, i:i + 1] * (xf @ expert_w[sel[i]] + expert_b[sel[i]])
    ref = ref.reshape(B, S, D)

    assert out.shape == (B, S, D) and out.dtype == x.dtype
    assert jnp.allclose(out, ref, atol=2e-5, rtol=2e-5)
    print("KERNEL_OK")
</pallas_src>

<mosaic_0001>
module attributes {stable_mosaic.version = 11 : i64} {
  func.func @_moe_kernel(%arg0: i32, %arg1: i32, %arg2: i32, %arg3: i32, %arg4: memref<2xi32, #tpu.memory_space<smem>>, %arg5: memref<1x16x1xf32, #tpu.memory_space<vmem>>, %arg6: memref<16x32xf32, #tpu.memory_space<vmem>>, %arg7: memref<1x32x128xf32, #tpu.memory_space<vmem>>, %arg8: memref<1x1x128xf32, #tpu.memory_space<vmem>>, %arg9: memref<16x128xf32, #tpu.memory_space<vmem>>, %arg10: memref<16x128xf32, #tpu.memory_space<vmem>>) attributes {dimension_semantics = [#tpu.dimension_semantics<parallel>, #tpu.dimension_semantics<parallel>, #tpu.dimension_semantics<arbitrary>, #tpu.dimension_semantics<arbitrary>], iteration_bounds = array<i64: 1, 1, 2, 1>, scalar_prefetch = 1 : i64, scratch_operands = 1 : i64, tpu.core_type = #tpu.core_type<tc>, window_params = [{transform_indices = @transform_0, window_bounds = array<i64: 1, 16, 1>}, {transform_indices = @transform_1, window_bounds = array<i64: 16, 32>}, {transform_indices = @transform_2, window_bounds = array<i64: 1, 32, 128>}, {transform_indices = @transform_3, window_bounds = array<i64: 1, 1, 128>}, {transform_indices = @transform_4, window_bounds = array<i64: 16, 128>}]} {
    %c0 = arith.constant 0 : index
    %c0_0 = arith.constant 0 : index
    %c0_1 = arith.constant 0 : index
    %0 = vector.load %arg5[%c0, %c0_0, %c0_1] : memref<1x16x1xf32, #tpu.memory_space<vmem>>, vector<1x16x1xf32>
    %1 = vector.shape_cast %0 : vector<1x16x1xf32> to vector<16x1xf32>
    %c0_2 = arith.constant 0 : index
    %c0_3 = arith.constant 0 : index
    %2 = vector.load %arg6[%c0_2, %c0_3] : memref<16x32xf32, #tpu.memory_space<vmem>>, vector<16x32xf32>
    %3 = vector.broadcast %1 : vector<16x1xf32> to vector<16x32xf32>
    %4 = arith.mulf %2, %3 : vector<16x32xf32>
    %c0_4 = arith.constant 0 : index
    %c0_5 = arith.constant 0 : index
    %c0_6 = arith.constant 0 : index
    %5 = vector.load %arg7[%c0_4, %c0_5, %c0_6] : memref<1x32x128xf32, #tpu.memory_space<vmem>>, vector<1x32x128xf32>
    %6 = vector.shape_cast %5 : vector<1x32x128xf32> to vector<32x128xf32>
    %cst = arith.constant dense<0.000000e+00> : vector<16x128xf32>
    %7 = tpu.matmul %4, %6, %cst {dimension_numbers = #tpu.dot_dimension_numbers<[1], [0], [0], [1], [0, 0, 1, 1], [], []>} : vector<16x32xf32>, vector<32x128xf32>, vector<16x128xf32> -> vector<16x128xf32>
    %c0_i32 = arith.constant 0 : i32
    %8 = arith.cmpi eq, %arg2, %c0_i32 : i32
    %c0_i32_7 = arith.constant 0 : i32
    %9 = arith.cmpi eq, %arg3, %c0_i32_7 : i32
    %10 = arith.andi %8, %9 : i1
    %11 = arith.extui %10 : i1 to i32
    %c0_i32_8 = arith.constant 0 : i32
    %12 = arith.cmpi ne, %11, %c0_i32_8 : i32
    scf.if %12 {
      %c0_14 = arith.constant 0 : index
      %c0_15 = arith.constant 0 : index
      %24 = vector.load %arg10[%c0_14, %c0_15] : memref<16x128xf32, #tpu.memory_space<vmem>>, vector<16x128xf32>
      tpu.vector_store %arg10[%c0_14, %c0_15], %7 {strides = array<i32>} : memref<16x128xf32, #tpu.memory_space<vmem>>, vector<16x128xf32>,
    } else {
    }
    %true = arith.constant true
    %13 = arith.xori %10, %true : i1
    %14 = arith.extui %13 : i1 to i32
    %c0_i32_9 = arith.constant 0 : i32
    %15 = arith.cmpi ne, %14, %c0_i32_9 : i32
    scf.if %15 {
      %c0_14 = arith.constant 0 : index
      %c0_15 = arith.constant 0 : index
      %24 = vector.load %arg10[%c0_14, %c0_15] : memref<16x128xf32, #tpu.memory_space<vmem>>, vector<16x128xf32>
      %25 = arith.addf %24, %7 : vector<16x128xf32>
      %c0_16 = arith.constant 0 : index
      %c0_17 = arith.constant 0 : index
      %26 = vector.load %arg10[%c0_16, %c0_17] : memref<16x128xf32, #tpu.memory_space<vmem>>, vector<16x128xf32>
      tpu.vector_store %arg10[%c0_16, %c0_17], %25 {strides = array<i32>} : memref<16x128xf32, #tpu.memory_space<vmem>>, vector<16x128xf32>,
    } else {
    }
    %c0_i32_10 = arith.constant 0 : i32
    %16 = arith.cmpi eq, %arg3, %c0_i32_10 : i32
    %17 = arith.extui %16 : i1 to i32
    %c0_i32_11 = arith.constant 0 : i32
    %18 = arith.cmpi ne, %17, %c0_i32_11 : i32
    scf.if %18 {
      %c0_14 = arith.constant 0 : index
      %c0_15 = arith.constant 0 : index
      %24 = vector.load %arg10[%c0_14, %c0_15] : memref<16x128xf32, #tpu.memory_space<vmem>>, vector<16x128xf32>
      %c0_16 = arith.constant 0 : index
      %c0_17 = arith.constant 0 : index
      %c0_18 = arith.constant 0 : index
      %25 = vector.load %arg8[%c0_16, %c0_17, %c0_18] : memref<1x1x128xf32, #tpu.memory_space<vmem>>, vector<1x1x128xf32>
      %26 = vector.shape_cast %25 : vector<1x1x128xf32> to vector<1x128xf32>
      %27 = vector.broadcast %1 : vector<16x1xf32> to vector<16x128xf32>
      %28 = vector.broadcast %26 : vector<1x128xf32> to vector<16x128xf32>
      %29 = arith.mulf %27, %28 : vector<16x128xf32>
      %30 = arith.addf %24, %29 : vector<16x128xf32>
      %c0_19 = arith.constant 0 : index
      %c0_20 = arith.constant 0 : index
      %31 = vector.load %arg10[%c0_19, %c0_20] : memref<16x128xf32, #tpu.memory_space<vmem>>, vector<16x128xf32>
      tpu.vector_store %arg10[%c0_19, %c0_20], %30 {strides = array<i32>} : memref<16x128xf32, #tpu.memory_space<vmem>>, vector<16x128xf32>,
    } else {
    }
    %c1_i32 = arith.constant 1 : i32
    %19 = arith.cmpi eq, %arg2, %c1_i32 : i32
    %c0_i32_12 = arith.constant 0 : i32
    %20 = arith.cmpi eq, %arg3, %c0_i32_12 : i32
    %21 = arith.andi %19, %20 : i1
    %22 = arith.extui %21 : i1 to i32
    %c0_i32_13 = arith.constant 0 : i32
    %23 = arith.cmpi ne, %22, %c0_i32_13 : i32
    scf.if %23 {
      %c0_14 = arith.constant 0 : index
      %c0_15 = arith.constant 0 : index
      %24 = vector.load %arg10[%c0_14, %c0_15] : memref<16x128xf32, #tpu.memory_space<vmem>>, vector<16x128xf32>
      %c0_16 = arith.constant 0 : index
      %c0_17 = arith.constant 0 : index
      %25 = vector.load %arg9[%c0_16, %c0_17] : memref<16x128xf32, #tpu.memory_space<vmem>>, vector<16x128xf32>
      tpu.vector_store %arg9[%c0_16, %c0_17], %24 {strides = array<i32>} : memref<16x128xf32, #tpu.memory_space<vmem>>, vector<16x128xf32>,
    } else {
    }
    return
  }
  func.func @transform_0(%arg0: i32, %arg1: i32, %arg2: i32, %arg3: i32, %arg4: memref<2xi32, #tpu.memory_space<smem>>) -> (i32, i32, i32) {
    %c0_i32 = arith.constant 0 : i32
    %c0_i32_0 = arith.constant 0 : i32
    return %arg2, %arg0, %c0_i32 : i32, i32, i32
  }
  func.func @transform_1(%arg0: i32, %arg1: i32, %arg2: i32, %arg3: i32, %arg4: memref<2xi32, #tpu.memory_space<smem>>) -> (i32, i32) {
    %c0_i32 = arith.constant 0 : i32
    return %arg0, %arg3 : i32, i32
  }
  func.func @transform_2(%arg0: i32, %arg1: i32, %arg2: i32, %arg3: i32, %arg4: memref<2xi32, #tpu.memory_space<smem>>) -> (i32, i32, i32) {
    %0 = arith.index_cast %arg2 : i32 to index
    %1 = memref.load %arg4[%0] : memref<2xi32, #tpu.memory_space<smem>>
    %c0_i32 = arith.constant 0 : i32
    return %1, %arg3, %arg1 : i32, i32, i32
  }
  func.func @transform_3(%arg0: i32, %arg1: i32, %arg2: i32, %arg3: i32, %arg4: memref<2xi32, #tpu.memory_space<smem>>) -> (i32, i32, i32) {
    %0 = arith.index_cast %arg2 : i32 to index
    %1 = memref.load %arg4[%0] : memref<2xi32, #tpu.memory_space<smem>>
    %c0_i32 = arith.constant 0 : i32
    %c0_i32_0 = arith.constant 0 : i32
    return %1, %c0_i32, %arg1 : i32, i32, i32
  }
  func.func @transform_4(%arg0: i32, %arg1: i32, %arg2: i32, %arg3: i32, %arg4: memref<2xi32, #tpu.memory_space<smem>>) -> (i32, i32) {
    %c0_i32 = arith.constant 0 : i32
    return %arg0, %arg1 : i32, i32
  }
}

</mosaic_0001>

<llo_original>
// kernel: sparse_moe_block.1
$region0: #{sparse_moe_block.1}
  #allocation0 [shape = 'u32[]', space=smem, size = 0x4, offset = 0x4, fixed_abs, tag = 'smem constant byte address 0x4 - core index']
  #allocation1 [shape = 'u32[144,128]{1,0:T(1,128)}', space=vmem, size = 0x12000, scoped, tag = 'internal scratch']
  #allocation2 [shape = 'f32[16,128]{1,0:T(8,128)}', space=vmem, size = 0x2000, scoped, tag = 'scratch operand']
  #allocation3 [shape = 's32[1]{0}', space=sflag, size = 0x4, scoped, tag = 'scoped memory for sparse_moe_block.1']
  #allocation4 [shape = 'u8[512]{0}', space=smem, size = 0x200, scoped, tag = 'prefetched SMEM operand 0']
  %s0 = inlined_call_operand.vmem [shape: s32[2], index: 0, kind: input, shape index: {}]
  %s1 = inlined_call_operand.vmem [shape: f32[2,16,1], index: 1, kind: input, shape index: {}]
  %s2 = inlined_call_operand.vmem [shape: f32[16,32], index: 2, kind: input, shape index: {}]
  %s3 = inlined_call_operand.vmem [shape: f32[4,32,128], index: 3, kind: input, shape index: {}]
  %s4 = inlined_call_operand.vmem [shape: f32[4,1,128], index: 4, kind: input, shape index: {}]
  %s5 = inlined_call_operand.vmem [shape: f32[16,128], index: 5, kind: output, shape index: {}]
  %s6 = sld [smem:[#allocation0]]
  $region65: #{sparse_moe_block.1} parent=0
    _
  %s8 = ssub.s32 1, %s6
  %s9 = scalar_select 0, %s8, %s6
  %s10 = sshll.u32 %s0, 4
  %s11 = int_to_ptr.vmem [resolvable:$true] %s10
  %13 = dma.vmem_to_smem %s11, 16, [#allocation4], [#allocation3]
  %14 = dma.done [#allocation3], 16
  %15 = sfence
  loop: start=0, step=1, limit=4
  $region2: #{sparse_moe_block.1} parent=0 // loop_pre_header
    _
  $region3: #{sparse_moe_block.1} parent=0 // loop_header
    %s17 = sphi 0, %s21
    %p18 = scmp.ge.s32.totalorder %s17, 4
    %s24 = sphi 0, %s50
    %s25 = sphi 0, %s46
    %s26 = sphi 0, %s42
    %s27 = sphi 0, %s38
    %s28 = sphi 0, %s24
    %s29 = sphi 0, %s25
    %s30 = sphi 0, %s26
    %s31 = sphi 0, %s27
    %s32 = sphi 0, %s28
    %s33 = sphi 0, %s29
    %s34 = sphi 0, %s30
    %s35 = sphi 0, %s31
    %s55 = sphi 0, %s57
    %s58 = sphi 0, %s55
    %s59 = sphi 0, %s58
    %s75 = sphi 0, %s59
    %s83 = sphi 0, %s85
    %s86 = sphi 0, %s83
    %s87 = sphi 0, %s86
    %s103 = sphi 0, %s87
    %s115 = sphi 0, %s117
    %s118 = sphi 0, %s115
    %s119 = sphi 0, %s118
    %s135 = sphi 0, %s119
    %s145 = sphi 0, %s147
    %s148 = sphi 0, %s145
    %s149 = sphi 0, %s148
    %s165 = sphi 0, %s149
    %s173 = sphi 0, %s175
    %s176 = sphi 0, %s173
    %s177 = sphi 0, %s176
    %s193 = sphi 0, %s177
  $region4: #{sparse_moe_block.1} parent=0 // loop_header_branch
    %20 = sbr.rel (%p18) target = $region8
  $region5: #{sparse_moe_block.1} parent=0 // loop_body
    %s22 = ssub.s32 %s17, 1
    %s23 = ssub.s32 %s17, 2
    %s36 = sadd.s32 1, %s27
    %p37 = scmp.ge.s32.totalorder %s36, 1
    %s38 = scalar_select %p37, 0, %s36
    %s39 = sadd.s32 1, %s26
    %s40 = scalar_select %p37, %s39, %s26
    %p41 = scmp.ge.s32.totalorder %s40, 2
    %s42 = scalar_select %p41, 0, %s40
    %s43 = sadd.s32 1, %s25
    %s44 = scalar_select %p41, %s43, %s25
    %p45 = scmp.ge.s32.totalorder %s44, 1
    %s46 = scalar_select %p45, 0, %s44
    %s47 = sadd.s32 1, %s24
    %s48 = scalar_select %p45, %s47, %s24
    %p49 = scmp.ge.s32.totalorder %s48, 1
    %s50 = scalar_select %p49, 0, %s48
    %s51 = ssub.s32 %s26, %s42
    %s52 = ssub.s32 %s24, %s50
    %s53 = sor.u32 %s51, %s52
    %p54 = scmp.eq.s32.totalorder %s53, 0
    %s56 = sadd.s32 %s55, 1
    %s57 = scalar_select %p54, %s55, %s56
    %p60 = pneg %p54
    %p61 = scmp.eq.s32.totalorder %s17, 1
    %p62 = por %p60, %p61
    %p63 = scmp.ne.s32.totalorder %s55, %s58
    %p64 = scmp.eq.s32.totalorder %s17, 0
    %p65 = por %p63, %p64
    %p66 = scmp.ne.s32.totalorder %s55, %s58
    %p67 = scmp.eq.s32.totalorder %s22, 1
    %p68 = por %p66, %p67
    %p69 = scmp.ne.s32.totalorder %s58, %s59
    %p70 = scmp.eq.s32.totalorder %s22, 0
    %p71 = por %p69, %p70
    %p72 = scmp.ne.s32.totalorder %s58, %s59
    %p73 = scmp.eq.s32.totalorder %s23, 1
    %p74 = por %p72, %p73
    %p76 = scmp.ne.s32.totalorder %s59, %s75
    %p77 = scmp.eq.s32.totalorder %s23, 0
    %p78 = por %p76, %p77
    %s79 = ssub.s32 %s24, %s50
    %s80 = ssub.s32 %s27, %s38
    %s81 = sor.u32 %s79, %s80
    %p82 = scmp.eq.s32.totalorder %s81, 0
    %s84 = sadd.s32 %s83, 1
    %s85 = scalar_select %p82, %s83, %s84
    %p88 = pneg %p82
    %p89 = scmp.eq.s32.totalorder %s17, 1
    %p90 = por %p88, %p89
    %p91 = scmp.ne.s32.totalorder %s83, %s86
    %p92 = scmp.eq.s32.totalorder %s17, 0
    %p93 = por %p91, %p92
    %p94 = scmp.ne.s32.totalorder %s83, %s86
    %p95 = scmp.eq.s32.totalorder %s22, 1
    %p96 = por %p94, %p95
    %p97 = scmp.ne.s32.totalorder %s86, %s87
    %p98 = scmp.eq.s32.totalorder %s22, 0
    %p99 = por %p97, %p98
    %p100 = scmp.ne.s32.totalorder %s86, %s87
    %p101 = scmp.eq.s32.totalorder %s23, 1
    %p102 = por %p100, %p101
    %p104 = scmp.ne.s32.totalorder %s87, %s103
    %p105 = scmp.eq.s32.totalorder %s23, 0
    %p106 = por %p104, %p105
    %s107 = sld [smem:[#allocation4 + %s26]]
    %s108 = sld [smem:[#allocation4 + %s42]]
    %s109 = ssub.s32 %s107, %s108
    %s110 = ssub.s32 %s27, %s38
    %s111 = sor.u32 %s109, %s110
    %s112 = ssub.s32 %s25, %s46
    %s113 = sor.u32 %s111, %s112
    %p114 = scmp.eq.s32.totalorder %s113, 0
    %s116 = sadd.s32 %s115, 1
    %s117 = scalar_select %p114, %s115, %s116
    %p120 = pneg %p114
    %p121 = scmp.eq.s32.totalorder %s17, 1
    %p122 = por %p120, %p121
    %p123 = scmp.ne.s32.totalorder %s115, %s118
    %p124 = scmp.eq.s32.totalorder %s17, 0
    %p125 = por %p123, %p124
    %p126 = scmp.ne.s32.totalorder %s115, %s118
    %p127 = scmp.eq.s32.totalorder %s22, 1
    %p128 = por %p126, %p127
    %p129 = scmp.ne.s32.totalorder %s118, %s119
    %p130 = scmp.eq.s32.totalorder %s22, 0
    %p131 = por %p129, %p130
    %p132 = scmp.ne.s32.totalorder %s118, %s119
    %p133 = scmp.eq.s32.totalorder %s23, 1
    %p134 = por %p132, %p133
    %p136 = scmp.ne.s32.totalorder %s119, %s135
    %p137 = scmp.eq.s32.totalorder %s23, 0
    %p138 = por %p136, %p137
    %s139 = sld [smem:[#allocation4 + %s26]]
    %s140 = sld [smem:[#allocation4 + %s42]]
    %s141 = ssub.s32 %s139, %s140
    %s142 = ssub.s32 %s25, %s46
    %s143 = sor.u32 %s141, %s142
    %p144 = scmp.eq.s32.totalorder %s143, 0
    %s146 = sadd.s32 %s145, 1
    %s147 = scalar_select %p144, %s145, %s146
    %p150 = pneg %p144
    %p151 = scmp.eq.s32.totalorder %s17, 1
    %p152 = por %p150, %p151
    %p153 = scmp.ne.s32.totalorder %s145, %s148
    %p154 = scmp.eq.s32.totalorder %s17, 0
    %p155 = por %p153, %p154
    %p156 = scmp.ne.s32.totalorder %s145, %s148
    %p157 = scmp.eq.s32.totalorder %s22, 1
    %p158 = por %p156, %p157
    %p159 = scmp.ne.s32.totalorder %s148, %s149
    %p160 = scmp.eq.s32.totalorder %s22, 0
    %p161 = por %p159, %p160
    %p162 = scmp.ne.s32.totalorder %s148, %s149
    %p163 = scmp.eq.s32.totalorder %s23, 1
    %p164 = por %p162, %p163
    %p166 = scmp.ne.s32.totalorder %s149, %s165
    %p167 = scmp.eq.s32.totalorder %s23, 0
    %p168 = por %p166, %p167
    %s169 = ssub.s32 %s24, %s50
    %s170 = ssub.s32 %s25, %s46
    %s171 = sor.u32 %s169, %s170
    %p172 = scmp.eq.s32.totalorder %s171, 0
    %s174 = sadd.s32 %s173, 1
    %s175 = scalar_select %p172, %s173, %s174
    %p178 = pneg %p172
    %p179 = scmp.eq.s32.totalorder %s17, 1
    %p180 = por %p178, %p179
    %p181 = scmp.ne.s32.totalorder %s173, %s176
    %p182 = scmp.eq.s32.totalorder %s17, 0
    %p183 = por %p181, %p182
    %p184 = scmp.ne.s32.totalorder %s173, %s176
    %p185 = scmp.eq.s32.totalorder %s22, 1
    %p186 = por %p184, %p185
    %p187 = scmp.ne.s32.totalorder %s176, %s177
    %p188 = scmp.eq.s32.totalorder %s22, 0
    %p189 = por %p187, %p188
    %p190 = scmp.ne.s32.totalorder %s176, %s177
    %p191 = scmp.eq.s32.totalorder %s23, 1
    %p192 = por %p190, %p191
    %p194 = scmp.ne.s32.totalorder %s177, %s193
    %p195 = scmp.eq.s32.totalorder %s23, 0
    %p196 = por %p194, %p195
    %p197 = scmp.le.s32.totalorder 1, %s17
    %p198 = scmp.lt.s32.totalorder %s17, 3
    %p199 = pnand %p197, %p198
    %p200 = pneg %p199
    // Predicated region
    $region9: #{sparse_moe_block.1} parent=5 // pred_check
      _
    $region10: #{sparse_moe_block.1} parent=5 // pred_check_branch
      %202 = sbr.rel (%p199) target = $region12
    $region11: #{sparse_moe_block.1} parent=5 // pred_region
      %s203 = ssub.s32 %s17, 1
      // Predicated region
      $region13: #{sparse_moe_block.1} parent=11 // pred_check
        %p204 = pneg %p99
      $region14: #{sparse_moe_block.1} parent=11 // pred_check_branch
        %206 = sbr.rel (%p204) target = $region16
      $region15: #{sparse_moe_block.1} parent=11 // pred_region
        %s207 = smul.u32 2, %s28
        %p208 = scmp.lt.s32.totalorder %s207, 1
        %s209 = scalar_select %p208, %s207, 1
        %p210 = scmp.lt.s32.totalorder %s31, 0
        %s211 = scalar_select %p210, %s31, 0
        %s212 = sadd.s32 %s211, %s209
        %s213 = smul.addr %s212, 8
        %s214 = scalar_lea.vmem %s2, %s213
        %s215 = smul.u32 2, %s28
      $region16: #{sparse_moe_block.1} parent=11 // pred_fallthru
        _
    $region12: #{sparse_moe_block.1} parent=5 // pred_fallthru
      _
    %p216 = scmp.lt.s32.totalorder %s17, 2
    // Predicated region
    $region17: #{sparse_moe_block.1} parent=5 // pred_check
      %p217 = pneg %p216
    $region18: #{sparse_moe_block.1} parent=5 // pred_check_branch
      %219 = sbr.rel (%p217) target = $region20
    $region19: #{sparse_moe_block.1} parent=5 // pred_region
      // Predicated region
      $region21: #{sparse_moe_block.1} parent=19 // pred_check
        %p220 = pneg %p65
      $region22: #{sparse_moe_block.1} parent=19 // pred_check_branch
        %222 = sbr.rel (%p220) target = $region24
      $region23: #{sparse_moe_block.1} parent=19 // pred_region
        %s223 = smul.u32 2, %s24
        %p224 = scmp.lt.s32.totalorder %s26, 1
        %s225 = scalar_select %p224, %s26, 1
        %p226 = scmp.lt.s32.totalorder %s223, 1
        %s227 = scalar_select %p226, %s223, 1
        %s228 = smul.addr %s225, 2
        %s229 = sadd.s32 %s227, %s228
        %s230 = smul.addr %s229, 8
        %s231 = scalar_lea.vmem %s1, %s230
        %s232 = smul.u32 2, %s24
      $region24: #{sparse_moe_block.1} parent=19 // pred_fallthru
        _
      // Predicated region
      $region25: #{sparse_moe_block.1} parent=19 // pred_check
        %p233 = pneg %p125
      $region26: #{sparse_moe_block.1} parent=19 // pred_check_branch
        %235 = sbr.rel (%p233) target = $region28
      $region27: #{sparse_moe_block.1} parent=19 // pred_region
        %s236 = sld [smem:[#allocation4 + %s26]]
        %s237 = smul.u32 4, %s27
        %p238 = scmp.lt.s32.totalorder %s236, 3
        %s239 = scalar_select %p238, %s236, 3
        %p240 = scmp.lt.s32.totalorder %s237, 3
        %s241 = scalar_select %p240, %s237, 3
        %p242 = scmp.lt.s32.totalorder %s25, 0
        %s243 = scalar_select %p242, %s25, 0
        %s244 = sadd.s32 %s243, %s241
        %s245 = smul.addr %s239, 4
        %s246 = sadd.s32 %s244, %s245
        %s247 = smul.addr %s246, 8
        %s248 = scalar_lea.vmem %s3, %s247
        %s249 = sld [smem:[#allocation4 + %s26]]
        %s250 = smul.u32 4, %s27
      $region28: #{sparse_moe_block.1} parent=19 // pred_fallthru
        _
      // Predicated region
      $region29: #{sparse_moe_block.1} parent=19 // pred_check
        %p251 = pneg %p155
      $region30: #{sparse_moe_block.1} parent=19 // pred_check_branch
        %253 = sbr.rel (%p251) target = $region32
      $region31: #{sparse_moe_block.1} parent=19 // pred_region
        %s254 = sld [smem:[#allocation4 + %s26]]
        %p255 = scmp.lt.s32.totalorder %s254, 3
        %s256 = scalar_select %p255, %s254, 3
        %p257 = scmp.lt.s32.totalorder %s25, 0
        %s258 = scalar_select %p257, %s25, 0
        %s259 = sadd.s32 %s258, %s256
        %s260 = scalar_lea.vmem %s4, %s259
        %s261 = sld [smem:[#allocation4 + %s26]]
      $region32: #{sparse_moe_block.1} parent=19 // pred_fallthru
        _
    $region20: #{sparse_moe_block.1} parent=5 // pred_fallthru
      _
    %p262 = scmp.le.s32.totalorder 1, %s17
    %p263 = scmp.lt.s32.totalorder %s17, 3
    %p264 = pnand %p262, %p263
    %p265 = pneg %p264
    // Predicated region
    $region33: #{sparse_moe_block.1} parent=5 // pred_check
      _
    $region34: #{sparse_moe_block.1} parent=5 // pred_check_branch
      %267 = sbr.rel (%p264) target = $region36
    $region35: #{sparse_moe_block.1} parent=5 // pred_region
      %s268 = ssub.s32 %s17, 1
      %s269 = smul.u32 2, %s28
      %p270 = scmp.lt.s32.totalorder %s30, 1
      %s271 = scalar_select %p270, %s30, 1
      %p272 = scmp.lt.s32.totalorder %s269, 1
      %s273 = scalar_select %p272, %s269, 1
      %s274 = smul.addr %s271, 2
      %s275 = sadd.s32 %s273, %s274
      %s276 = smul.addr %s275, 8
      %s277 = scalar_lea.vmem %s1, %s276
      %p278 = pneg %p71
      %p279 = pneg %p68
      %s280 = smul.u32 2, %s28
      %p281 = scmp.lt.s32.totalorder %s280, 1
      %s282 = scalar_select %p281, %s280, 1
      %p283 = scmp.lt.s32.totalorder %s31, 0
      %s284 = scalar_select %p283, %s31, 0
      %s285 = sadd.s32 %s284, %s282
      %s286 = smul.addr %s285, 8
      %s287 = scalar_lea.vmem %s2, %s286
      %p288 = pneg %p99
      %p289 = pneg %p96
      %s290 = sld [smem:[#allocation4 + %s30]]
      %s291 = smul.u32 4, %s31
      %p292 = scmp.lt.s32.totalorder %s290, 3
      %s293 = scalar_select %p292, %s290, 3
      %p294 = scmp.lt.s32.totalorder %s291, 3
      %s295 = scalar_select %p294, %s291, 3
      %p296 = scmp.lt.s32.totalorder %s29, 0
      %s297 = scalar_select %p296, %s29, 0
      %s298 = sadd.s32 %s297, %s295
      %s299 = smul.addr %s293, 4
      %s300 = sadd.s32 %s298, %s299
      %s301 = smul.addr %s300, 8
      %s302 = scalar_lea.vmem %s3, %s301
      %p303 = pneg %p131
      %p304 = pneg %p128
      %s305 = sld [smem:[#allocation4 + %s30]]
      %p306 = scmp.lt.s32.totalorder %s305, 3
      %s307 = scalar_select %p306, %s305, 3
      %p308 = scmp.lt.s32.totalorder %s29, 0
      %s309 = scalar_select %p308, %s29, 0
      %s310 = sadd.s32 %s309, %s307
      %s311 = scalar_lea.vmem %s4, %s310
      %p312 = pneg %p161
      %p313 = pneg %p158
      %p314 = pneg %p189
      %p315 = pneg %p186
      %s316 = smul.u32 2, %s28
      %p317 = scmp.lt.s32.totalorder %s316, 1
      %s318 = scalar_select %p317, %s316, 1
      %p319 = scmp.lt.s32.totalorder %s29, 0
      %s320 = scalar_select %p319, %s29, 0
      %s321 = sadd.s32 %s320, %s318
      %s322 = smul.addr %s321, 8
      %s323 = scalar_lea.vmem %s5, %s322
      %s324 = smul.u32 2, %s28
      %p325 = scmp.lt.s32.totalorder %s30, 1
      %s326 = scalar_select %p325, %s30, 1
      %p327 = scmp.lt.s32.totalorder %s324, 1
      %s328 = scalar_select %p327, %s324, 1
      %s329 = smul.addr %s326, 2
      %s330 = sadd.s32 %s328, %s329
      %s331 = smul.addr %s330, 8
      %s332 = scalar_lea.vmem %s1, %s331
      %s333 = smul.u32 2, %s28
      %s334 = smul.u32 2, %s28
      %p335 = scmp.lt.s32.totalorder %s334, 1
      %s336 = scalar_select %p335, %s334, 1
      %p337 = scmp.lt.s32.totalorder %s31, 0
      %s338 = scalar_select %p337, %s31, 0
      %s339 = sadd.s32 %s338, %s336
      %s340 = smul.addr %s339, 8
      %s341 = scalar_lea.vmem %s2, %s340
      %s342 = smul.u32 2, %s28
      %s343 = sld [smem:[#allocation4 + %s30]]
      %s344 = smul.u32 4, %s31
      %p345 = scmp.lt.s32.totalorder %s343, 3
      %s346 = scalar_select %p345, %s343, 3
      %p347 = scmp.lt.s32.totalorder %s344, 3
      %s348 = scalar_select %p347, %s344, 3
      %p349 = scmp.lt.s32.totalorder %s29, 0
      %s350 = scalar_select %p349, %s29, 0
      %s351 = sadd.s32 %s350, %s348
      %s352 = smul.addr %s346, 4
      %s353 = sadd.s32 %s351, %s352
      %s354 = smul.addr %s353, 8
      %s355 = scalar_lea.vmem %s3, %s354
      %s356 = sld [smem:[#allocation4 + %s30]]
      %s357 = smul.u32 4, %s31
      %s358 = sld [smem:[#allocation4 + %s30]]
      %p359 = scmp.lt.s32.totalorder %s358, 3
      %s360 = scalar_select %p359, %s358, 3
      %p361 = scmp.lt.s32.totalorder %s29, 0
      %s362 = scalar_select %p361, %s29, 0
      %s363 = sadd.s32 %s362, %s360
      %s364 = scalar_lea.vmem %s4, %s363
      %s365 = sld [smem:[#allocation4 + %s30]]
      %s366 = smul.u32 2, %s28
      %p367 = scmp.lt.s32.totalorder %s366, 1
      %s368 = scalar_select %p367, %s366, 1
      %p369 = scmp.lt.s32.totalorder %s29, 0
      %s370 = scalar_select %p369, %s29, 0
      %s371 = sadd.s32 %s370, %s368
      %s372 = smul.addr %s371, 8
      %s373 = scalar_lea.vmem %s5, %s372
      %s374 = smul.u32 2, %s28
      %v375 = vld [vmem:[%s332] sm:$0xff]
      %v376 = vld [vmem:[%s332 + $0x8] sm:$0xff]
      %v377 = vld [vmem:[%s341] sm:$0xff]
      %v378 = vld [vmem:[%s341 + $0x8] sm:$0xff]
      %380 = vset.pattern.permute.xlu0 0
      %381 = vperm.xlu0 %380, %v375
      %v382 = vpop.permute.xlu0 %381
      %385 = vset.pattern.permute.xlu0 0
      %386 = vperm.xlu0 %385, %v376
      %v387 = vpop.permute.xlu0 %386
      %v389 = vmul.f32 %v377, %v382
      %v390 = vmul.f32 %v378, %v387
      %v391 = vld [vmem:[%s355] sm:$0xff]
      %v392 = vld [vmem:[%s355 + $0x8] sm:$0xff]
      %v393 = vld [vmem:[%s355 + $0x10] sm:$0xff]
      %v394 = vld [vmem:[%s355 + $0x18] sm:$0xff]
      %vm395 = vcmask 261120
      %v397 = vsel %vm395, %v389, 0
      %v400 = vsel %vm395, %v390, 0
      %402 = vmatprep.subr.mxu0 0.0
      %403 = vmatpush1.msra.mxu0 0.0
      %404 = vmatprep.subr.mxu0 0.0
      %405 = vmatpush1.msra.mxu0 0.0
      %406 = vmatprep.subr.mxu0 0.0
      %407 = vmatpush1.msra.mxu0 0.0
      %408 = vmatprep.subr.mxu0 0.0
      %409 = vmatpush1.msra.mxu0 0.0
      %410 = vmatprep.subr.mxu0 0.0
      %411 = vmatpush1.msra.mxu0 0.0
      %412 = vmatprep.subr.mxu0 0.0
      %413 = vmatpush1.msra.mxu0 0.0
      %414 = vmatprep.subr.mxu0 0.0
      %415 = vmatpush1.msra.mxu0 0.0
      %416 = vmatprep.subr.mxu0 0.0
      %417 = vmatpush1.msra.mxu0 0.0
      %418 = vmatprep.subr.mxu0 0.0
      %419 = vmatpush1.msra.mxu0 0.0
      %420 = vmatprep.subr.mxu0 0.0
      %421 = vmatpush1.msra.mxu0 0.0
      %422 = vmatprep.subr.mxu0 0.0
      %423 = vmatpush1.msra.mxu0 0.0
      %424 = vmatprep.subr.mxu0 0.0
      %425 = vmatpush1.msra.mxu0 0.0
      %426 = vmatprep.subr.mxu0 0.0
      %427 = vmatpush1.msra.mxu0 %v394
      %428 = vmatprep.subr.mxu0 0.0
      %429 = vmatpush1.msra.mxu0 %v393
      %430 = vmatprep.subr.mxu0 0.0
      %431 = vmatpush1.msra.mxu0 %v392
      %432 = vmatprep.subr.mxu0 0.0
      %433 = vmatpush1.msra.mxu0 %v391
      %434 = vmatprep.subr.mxu0 0.0
      %435 = vmatpush2.msra.mxu0 0.0
      %436 = vmatprep.subr.mxu0 0.0
      %437 = vmatpush2.msra.mxu0 0.0
      %438 = vmatprep.subr.mxu0 0.0
      %439 = vmatpush2.msra.mxu0 0.0
      %440 = vmatprep.subr.mxu0 0.0
      %441 = vmatpush2.msra.mxu0 0.0
      %442 = vmatprep.subr.mxu0 0.0
      %443 = vmatpush2.msra.mxu0 0.0
      %444 = vmatprep.subr.mxu0 0.0
      %445 = vmatpush2.msra.mxu0 0.0
      %446 = vmatprep.subr.mxu0 0.0
      %447 = vmatpush2.msra.mxu0 0.0
      %448 = vmatprep.subr.mxu0 0.0
      %449 = vmatpush2.msra.mxu0 0.0
      %450 = vmatprep.subr.mxu0 0.0
      %451 = vmatpush2.msra.mxu0 0.0
      %452 = vmatprep.subr.mxu0 0.0
      %453 = vmatpush2.msra.mxu0 0.0
      %454 = vmatprep.subr.mxu0 0.0
      %455 = vmatpush2.msra.mxu0 0.0
      %456 = vmatprep.subr.mxu0 0.0
      %457 = vmatpush2.msra.mxu0 0.0
      %458 = vmatprep.subr.mxu0 0.0
      %459 = vmatpush2.msra.mxu0 0.0
      %460 = vmatprep.subr.mxu0 0.0
      %461 = vmatpush2.msra.mxu0 0.0
      %462 = vmatprep.subr.mxu0 0.0
      %463 = vmatpush2.msra.mxu0 0.0
      %464 = vmatprep.subr.mxu0 0.0
      %465 = vmatpush2.msra.mxu0 0.0
      %466 = vmatprep.mubr.f32.mxu0 0.0
      %467 = vmatmul.mubr.f32.gmra.mxu0 %v397
      %v468 = vpop.f32.mrf.mxu0
      %v469 = vadd.f32 0.0, %v468
      %v470 = vpop.f32.mrf.mxu0
      %471 = vmatprep.mubr.f32.mxu0 0.0
      %472 = vmatmul.mubr.f32.gmra.mxu0 %v400
      %v473 = vpop.f32.mrf.mxu0
      %v474 = vadd.f32 0.0, %v473
      %v475 = vpop.f32.mrf.mxu0
      %476 = vdwg.mxu0
      %p477 = scmp.eq.s32.totalorder %s30, 0
      %p478 = scmp.eq.s32.totalorder %s31, 0
      %p479 = pnand %p477, %p478
      %p480 = pneg %p479
      // Predicated region
      $region37: #{sparse_moe_block.1} parent=35 // pred_check
        _
      $region38: #{sparse_moe_block.1} parent=35 // pred_check_branch
        %482 = sbr.rel (%p479) target = $region40
      $region39: #{sparse_moe_block.1} parent=35 // pred_region
        %483 = vst [vmem:[#allocation2] sm:$0xff] %v469
        %484 = vst [vmem:[#allocation2 + $0x8] sm:$0xff] %v474
      $region40: #{sparse_moe_block.1} parent=35 // pred_fallthru
        _
      %p485 = pneg %p480
      // Predicated region
      $region41: #{sparse_moe_block.1} parent=35 // pred_check
        _
      $region42: #{sparse_moe_block.1} parent=35 // pred_check_branch
        %487 = sbr.rel (%p480) target = $region44
      $region43: #{sparse_moe_block.1} parent=35 // pred_region
        %v488 = vld [vmem:[#allocation2] sm:$0xff]
        %v489 = vld [vmem:[#allocation2 + $0x8] sm:$0xff]
        %v490 = vadd.f32 %v488, %v469
        %v491 = vadd.f32 %v489, %v474
        %492 = vst [vmem:[#allocation2] sm:$0xff] %v490
        %493 = vst [vmem:[#allocation2 + $0x8] sm:$0xff] %v491
      $region44: #{sparse_moe_block.1} parent=35 // pred_fallthru
        _
      // Predicated region
      $region45: #{sparse_moe_block.1} parent=35 // pred_check
        %p494 = pneg %p478
      $region46: #{sparse_moe_block.1} parent=35 // pred_check_branch
        %496 = sbr.rel (%p494) target = $region48
      $region47: #{sparse_moe_block.1} parent=35 // pred_region
        %v497 = vld [vmem:[#allocation2] sm:$0xff]
        %v498 = vld [vmem:[#allocation2 + $0x8] sm:$0xff]
        %v499 = vld [vmem:[%s364] sm:$0x1]
        %v501 = vlaneseq
        %v502 = vshrl.u32 %v501, 7
        %v503 = vsub.s32 0, %v502
        %v504 = vrot.slane %v499, %v503
        %v506 = vmul.f32 %v382, %v504
        %v507 = vmul.f32 %v387, %v504
        %v508 = vadd.f32 %v497, %v506
        %v509 = vadd.f32 %v498, %v507
        %510 = vst [vmem:[#allocation2] sm:$0xff] %v508
        %511 = vst [vmem:[#allocation2 + $0x8] sm:$0xff] %v509
      $region48: #{sparse_moe_block.1} parent=35 // pred_fallthru
        _
      %p512 = scmp.eq.s32.totalorder %s30, 1
      %p513 = pnand %p512, %p478
      %p514 = pneg %p513
      // Predicated region
      $region49: #{sparse_moe_block.1} parent=35 // pred_check
        _
      $region50: #{sparse_moe_block.1} parent=35 // pred_check_branch
        %516 = sbr.rel (%p513) target = $region52
      $region51: #{sparse_moe_block.1} parent=35 // pred_region
        %v517 = vld [vmem:[#allocation2] sm:$0xff]
        %v518 = vld [vmem:[#allocation2 + $0x8] sm:$0xff]
        %519 = vst [vmem:[%s373] sm:$0xff] %v517
        %520 = vst [vmem:[%s373 + $0x8] sm:$0xff] %v518
      $region52: #{sparse_moe_block.1} parent=35 // pred_fallthru
        _
      %s521 = smul.u32 2, %s28
      %p522 = scmp.lt.s32.totalorder %s521, 1
      %s523 = scalar_select %p522, %s521, 1
      %p524 = scmp.lt.s32.totalorder %s29, 0
      %s525 = scalar_select %p524, %s29, 0
      %s526 = sadd.s32 %s525, %s523
      %s527 = smul.addr %s526, 8
      %s528 = scalar_lea.vmem %s5, %s527
      // Predicated region
      $region53: #{sparse_moe_block.1} parent=35 // pred_check
        %p529 = pneg %p186
      $region54: #{sparse_moe_block.1} parent=35 // pred_check_branch
        %531 = sbr.rel (%p529) target = $region56
      $region55: #{sparse_moe_block.1} parent=35 // pred_region
        %s532 = smul.u32 2, %s28
      $region56: #{sparse_moe_block.1} parent=35 // pred_fallthru
        _
      // Predicated region
      $region57: #{sparse_moe_block.1} parent=35 // pred_check
        %p533 = pneg %p186
      $region58: #{sparse_moe_block.1} parent=35 // pred_check_branch
        %535 = sbr.rel (%p533) target = $region60
      $region59: #{sparse_moe_block.1} parent=35 // pred_region
        %s536 = smul.u32 2, %s28
        %p537 = scmp.lt.s32.totalorder %s536, 1
        %s538 = scalar_select %p537, %s536, 1
        %p539 = scmp.lt.s32.totalorder %s29, 0
        %s540 = scalar_select %p539, %s29, 0
        %s541 = sadd.s32 %s540, %s538
        %s542 = smul.addr %s541, 8
        %s543 = scalar_lea.vmem %s5, %s542
      $region60: #{sparse_moe_block.1} parent=35 // pred_fallthru
        _
    $region36: #{sparse_moe_block.1} parent=5 // pred_fallthru
      _
    %p544 = scmp.le.s32.totalorder 2, %s17
    // Predicated region
    $region61: #{sparse_moe_block.1} parent=5 // pred_check
      %p545 = pneg %p544
    $region62: #{sparse_moe_block.1} parent=5 // pred_check_branch
      %547 = sbr.rel (%p545) target = $region64
    $region63: #{sparse_moe_block.1} parent=5 // pred_region
      %s548 = ssub.s32 %s17, 2
    $region64: #{sparse_moe_block.1} parent=5 // pred_fallthru
      _
  $region6: #{sparse_moe_block.1} parent=0 // loop_footer
    %s21 = sadd.s32 1, %s17
  $region7: #{sparse_moe_block.1} parent=0 // loop_footer_branch
    %16 = sbr.rel target = $region3
  $region8: #{sparse_moe_block.1} parent=0 // loop_exit
    _

</llo_original>
